<compile_context>
chip_gen: v7x
topology: tpu7x:2x2x1
jax: 0.10.0
libtpu: 0.0.40
codegen_flags: <defaults>
</compile_context>

<pallas_src>
import functools

import jax
import jax.numpy as jnp
import numpy as np
from jax.experimental import pallas as pl
from jax.experimental.pallas import tpu as pltpu


def _conv_bn_relu_kernel(w_ref, b_ref, x_ref, o_ref):
    # w_ref: [C_out, K]   bf16 weights with BN scale pre-folded (resident; constant map)
    # b_ref: [C_out, 1]   f32 BN shift
    # x_ref: [K, TM]      bf16 patches^T tile (lane-dense)
    # o_ref: [C_out, TM]  output tile (lane-dense)
    acc = jnp.dot(w_ref[...], x_ref[...], preferred_element_type=jnp.float32)
    y = acc + b_ref[...]                       # broadcast per-channel shift over lanes
    o_ref[...] = jnp.maximum(y, 0.0).astype(o_ref.dtype)


def _round_up(x, m):
    return pl.cdiv(x, m) * m


def _choose_tile_m(M, K, C_out, in_bytes, out_bytes,
                   budget_bytes=10 * 1024 * 1024):
    """Pick the M-tile width.

    Budget: double-buffered patches tile + double-buffered output tile (+ the tiny
    resident weights/bias) must fit ~10 MiB -> safe under the default scoped VMEM
    limit on every generation (v5e 16 MiB, v6e/v7x 32 MiB) with headroom for Mosaic
    internals.  No artificial upper cap beyond a 64K sanity bound (review item 1).
    """
    if M <= 128:
        return M                                  # single full-dim block, legal layout
    fixed = 2 * (C_out * K * in_bytes + C_out * 4)          # weights + bias buffers
    per_col = 2 * K * in_bytes + 2 * C_out * out_bytes       # per M column, dbl-buffered
    tm = (budget_bytes - fixed) // max(per_col, 1)
    tm = max(128, (tm // 128) * 128)
    tm = min(tm, 65536)
    # v7x has 2 TensorCores: keep >= 2 grid steps so dimension_semantics=("parallel",)
    # actually shards the work (harmless on v5e/v6e).
    tm_two_steps = max(128, _round_up(pl.cdiv(M, 2), 128))
    return min(tm, tm_two_steps)


@functools.partial(jax.jit, static_argnames=("eps", "compute_dtype"))
def downsample_x4(x, conv_w, bn_gamma, bn_beta, bn_mean, bn_var,
                  eps=1e-5, compute_dtype=jnp.bfloat16):
    """x: [N, C_in, H, W] (NCHW).  conv_w: [C_out, C_in, 4, 4].  Returns NCHW."""
    N, C_in, H, W = x.shape
    C_out = conv_w.shape[0]
    Ho, Wo = H // 4, W // 4                    # stride-4, pad-0 conv floors like PyTorch
    x = x[:, :, :Ho * 4, :Wo * 4]
    M = N * Ho * Wo
    K = C_in * 16

    # ---- fold BatchNorm (inference) into per-channel scale & shift -----------------
    inv_std = jax.lax.rsqrt(bn_var.astype(jnp.float32) + eps)
    scale = bn_gamma.astype(jnp.float32) * inv_std                        # [C_out]
    shift = bn_beta.astype(jnp.float32) - scale * bn_mean.astype(jnp.float32)

    # scale folded into the weight matrix: [C_out, C_in, 4, 4] -> [C_out, K]
    w_mat = (conv_w.reshape(C_out, K).astype(jnp.float32) * scale[:, None]
             ).astype(compute_dtype)
    bias = shift.reshape(C_out, 1)                                        # f32

    # ---- im2col^T: non-overlapping 4x4 patches, K unrolled as (C_in, kh, kw) -------
    # [K, M], M row-major over (N, Ho, Wo); matches the Conv2d weight unroll above.
    # (See TODO at top of file about fusing this pass into the kernel.)
    pt = x.reshape(N, C_in, Ho, 4, Wo, 4)
    pt = jnp.transpose(pt, (1, 3, 5, 0, 2, 4)).reshape(K, M).astype(compute_dtype)

    out_dtype = x.dtype
    in_bytes = jnp.dtype(compute_dtype).itemsize
    out_bytes = jnp.dtype(out_dtype).itemsize

    TM = _choose_tile_m(M, K, C_out, in_bytes, out_bytes)
    grid_m = pl.cdiv(M, TM)                    # partial last block handled by Pallas

    cost = pl.CostEstimate(
        flops=2 * M * K * C_out,
        transcendentals=0,
        bytes_accessed=(K * M * in_bytes + C_out * K * in_bytes
                        + C_out * 4 + C_out * M * out_bytes),
    )

    out_t = pl.pallas_call(
        _conv_bn_relu_kernel,
        out_shape=jax.ShapeDtypeStruct((C_out, M), out_dtype),
        grid_spec=pltpu.PrefetchScalarGridSpec(
            num_scalar_prefetch=0,
            grid=(grid_m,),
            in_specs=[
                pl.BlockSpec((C_out, K), lambda i: (0, 0)),   # weights (constant block)
                pl.BlockSpec((C_out, 1), lambda i: (0, 0)),   # bias    (constant block)
                pl.BlockSpec((K, TM), lambda i: (0, i)),      # patches^T tile
            ],
            out_specs=pl.BlockSpec((C_out, TM), lambda i: (0, i)),
        ),
        compiler_params=pltpu.CompilerParams(
            dimension_semantics=("parallel",),                # v7x: shard across 2 TCs
        ),
        cost_estimate=cost,
    )(w_mat, bias, pt)

    # ---- glue: [C_out, M] -> NCHW (output is 16x smaller spatially than the input) --
    out = out_t.reshape(C_out, N, Ho, Wo)
    return jnp.transpose(out, (1, 0, 2, 3))


def _reference(x, conv_w, bn_gamma, bn_beta, bn_mean, bn_var, eps=1e-5):
    y = jax.lax.conv_general_dilated(
        x, conv_w, window_strides=(4, 4), padding="VALID",
        dimension_numbers=("NCHW", "OIHW", "NCHW"))
    inv_std = 1.0 / jnp.sqrt(bn_var + eps)
    scale = (bn_gamma * inv_std)[None, :, None, None]
    shift = (bn_beta - bn_gamma * bn_mean * inv_std)[None, :, None, None]
    return jnp.maximum(y * scale + shift, 0.0)


def _check(key, N, C_in, H, W, C_out):
    k_x, k_w, k_g, k_b, k_m, k_v = jax.random.split(key, 6)
    x = jax.random.normal(k_x, (N, C_in, H, W), dtype=jnp.float32)
    conv_w = jax.random.normal(k_w, (C_out, C_in, 4, 4), dtype=jnp.float32) * 0.1
    bn_gamma = jax.random.normal(k_g, (C_out,), dtype=jnp.float32) * 0.1 + 1.0
    bn_beta = jax.random.normal(k_b, (C_out,), dtype=jnp.float32) * 0.1
    bn_mean = jax.random.normal(k_m, (C_out,), dtype=jnp.float32) * 0.1
    bn_var = jnp.abs(jax.random.normal(k_v, (C_out,), dtype=jnp.float32)) * 0.1 + 1.0

    out = downsample_x4(x, conv_w, bn_gamma, bn_beta, bn_mean, bn_var)
    out = jax.block_until_ready(out)
    ref = _reference(x, conv_w, bn_gamma, bn_beta, bn_mean, bn_var)
    # Tolerance reflects the deliberate bf16 input/weight cast (f32 accumulation and
    # f32 epilogue keep the error at the bf16-rounding level of the inputs).
    np.testing.assert_allclose(np.asarray(out), np.asarray(ref), rtol=2e-2, atol=2e-2)


if __name__ == "__main__":
    key = jax.random.PRNGKey(0)
    k1, k2 = jax.random.split(key)

    # Small canonical shape from the module spec (single full block, M < 128).
    _check(k1, N=2, C_in=4, H=16, W=16, C_out=8)
    # Slightly larger shape to exercise the multi-step grid + partial last block path
    # (M = 1152, TM = 640 -> 2 "parallel" steps, second block partial, no padding).
    _check(k2, N=2, C_in=4, H=96, W=96, C_out=8)

    print("KERNEL_OK")
</pallas_src>

<mosaic_0001>
module attributes {stable_mosaic.version = 11 : i64} {
  func.func @_conv_bn_relu_kernel(%arg0: i32, %arg1: memref<8x64xbf16, #tpu.memory_space<vmem>>, %arg2: memref<8x1xf32, #tpu.memory_space<vmem>>, %arg3: memref<64x32xbf16, #tpu.memory_space<vmem>>, %arg4: memref<8x32xf32, #tpu.memory_space<vmem>>) attributes {dimension_semantics = [#tpu.dimension_semantics<parallel>], iteration_bounds = array<i64: 1>, scalar_prefetch = 0 : i64, scratch_operands = 0 : i64, tpu.core_type = #tpu.core_type<tc>, window_params = [{pipeline_mode = #tpu.pipeline_mode<synchronous>, transform_indices = @transform_0, window_bounds = array<i64: 8, 64>}, {pipeline_mode = #tpu.pipeline_mode<synchronous>, transform_indices = @transform_1, window_bounds = array<i64: 8, 1>}, {transform_indices = @transform_2, window_bounds = array<i64: 64, 32>}, {transform_indices = @transform_3, window_bounds = array<i64: 8, 32>}]} {
    %c0 = arith.constant 0 : index
    %c0_0 = arith.constant 0 : index
    %0 = vector.load %arg1[%c0, %c0_0] : memref<8x64xbf16, #tpu.memory_space<vmem>>, vector<8x64xbf16>
    %c0_1 = arith.constant 0 : index
    %c0_2 = arith.constant 0 : index
    %1 = vector.load %arg3[%c0_1, %c0_2] : memref<64x32xbf16, #tpu.memory_space<vmem>>, vector<64x32xbf16>
    %cst = arith.constant dense<0.000000e+00> : vector<8x32xf32>
    %2 = tpu.matmul %0, %1, %cst {dimension_numbers = #tpu.dot_dimension_numbers<[1], [0], [0], [1], [0, 0, 1, 1], [], []>} : vector<8x64xbf16>, vector<64x32xbf16>, vector<8x32xf32> -> vector<8x32xf32>
    %c0_3 = arith.constant 0 : index
    %c0_4 = arith.constant 0 : index
    %3 = vector.load %arg2[%c0_3, %c0_4] : memref<8x1xf32, #tpu.memory_space<vmem>>, vector<8x1xf32>
    %4 = vector.broadcast %3 : vector<8x1xf32> to vector<8x32xf32>
    %5 = arith.addf %2, %4 : vector<8x32xf32>
    %cst_5 = arith.constant 0.000000e+00 : f32
    %6 = vector.broadcast %cst_5 : f32 to vector<8x32xf32>
    %7 = arith.maximumf %5, %6 : vector<8x32xf32>
    %c0_6 = arith.constant 0 : index
    %c0_7 = arith.constant 0 : index
    %8 = vector.load %arg4[%c0_6, %c0_7] : memref<8x32xf32, #tpu.memory_space<vmem>>, vector<8x32xf32>
    tpu.vector_store %arg4[%c0_6, %c0_7], %7 {strides = array<i32>} : memref<8x32xf32, #tpu.memory_space<vmem>>, vector<8x32xf32>,
    return
  }
  func.func @transform_0(%arg0: i32) -> (i32, i32) {
    %c0_i32 = arith.constant 0 : i32
    %c0_i32_0 = arith.constant 0 : i32
    %c0_i32_1 = arith.constant 0 : i32
    return %c0_i32, %c0_i32_0 : i32, i32
  }
  func.func @transform_1(%arg0: i32) -> (i32, i32) {
    %c0_i32 = arith.constant 0 : i32
    %c0_i32_0 = arith.constant 0 : i32
    %c0_i32_1 = arith.constant 0 : i32
    return %c0_i32, %c0_i32_0 : i32, i32
  }
  func.func @transform_2(%arg0: i32) -> (i32, i32) {
    %c0_i32 = arith.constant 0 : i32
    %c0_i32_0 = arith.constant 0 : i32
    return %c0_i32, %arg0 : i32, i32
  }
  func.func @transform_3(%arg0: i32) -> (i32, i32) {
    %c0_i32 = arith.constant 0 : i32
    %c0_i32_0 = arith.constant 0 : i32
    return %c0_i32, %arg0 : i32, i32
  }
}

</mosaic_0001>

<llo_original>
// kernel: downsample_x4.1
$region0: #{downsample_x4.1}
  #allocation0 [shape = 'u32[]', space=smem, size = 0x4, offset = 0x4, fixed_abs, tag = 'smem constant byte address 0x4 - core index']
  #allocation1 [shape = 'u32[144,128]{1,0:T(1,128)}', space=vmem, size = 0x12000, scoped, tag = 'internal scratch']
  %s0 = inlined_call_operand.vmem [shape: bf16[8,64], index: 0, kind: input, shape index: {}]
  %s1 = inlined_call_operand.vmem [shape: f32[8,1], index: 1, kind: input, shape index: {}]
  %s2 = inlined_call_operand.vmem [shape: bf16[64,32], index: 2, kind: input, shape index: {}]
  %s3 = inlined_call_operand.vmem [shape: f32[8,32], index: 3, kind: output, shape index: {}]
  %s4 = sld [smem:[#allocation0]]
  $region22: #{downsample_x4.1} parent=0
    _
  %s6 = ssub.s32 1, %s4
  %s7 = scalar_select 0, %s6, %s4
  // Predicated region
  $region2: #{downsample_x4.1} parent=0 // pred_check
    _
  $region3: #{downsample_x4.1} parent=0 // pred_check_branch
    %9 = sbr.rel (0) target = $region5
  $region4: #{downsample_x4.1} parent=0 // pred_region
    _
  $region5: #{downsample_x4.1} parent=0 // pred_fallthru
    _
  // Predicated region
  $region6: #{downsample_x4.1} parent=0 // pred_check
    _
  $region7: #{downsample_x4.1} parent=0 // pred_check_branch
    %11 = sbr.rel (0) target = $region9
  $region8: #{downsample_x4.1} parent=0 // pred_region
    _
  $region9: #{downsample_x4.1} parent=0 // pred_fallthru
    _
  // Predicated region
  $region10: #{downsample_x4.1} parent=0 // pred_check
    _
  $region11: #{downsample_x4.1} parent=0 // pred_check_branch
    %13 = sbr.rel (0) target = $region13
  $region12: #{downsample_x4.1} parent=0 // pred_region
    _
  $region13: #{downsample_x4.1} parent=0 // pred_fallthru
    _
  %v15 = vld [vmem:[%s0] sm:$0xf]
  %v16 = vld [vmem:[%s2] sm:$0xf]
  %v17 = vld [vmem:[%s2 + $0x4] sm:$0xf]
  %v18 = vld [vmem:[%s2 + $0x8] sm:$0xf]
  %v19 = vld [vmem:[%s2 + $0xc] sm:$0xf]
  %v20 = vld [vmem:[%s2 + $0x10] sm:$0xf]
  %v21 = vld [vmem:[%s2 + $0x14] sm:$0xf]
  %v22 = vld [vmem:[%s2 + $0x18] sm:$0xf]
  %v23 = vld [vmem:[%s2 + $0x1c] sm:$0xf]
  %v24 = vld [vmem:[%s1] sm:$0xff]
  %26 = vset.pattern.permute.xlu0 0
  %27 = vperm.xlu0 %26, %v24
  %v28 = vpop.permute.xlu0 %27
  %v38 = vunpack.c.l.b16 %v16
  %v39 = vunpack.c.l.b16 %v17
  %v40 = vunpack.c.l.b16 %v18
  %v41 = vunpack.c.l.b16 %v19
  %v42 = vunpack.c.l.b16 %v20
  %v43 = vunpack.c.l.b16 %v21
  %v44 = vunpack.c.l.b16 %v22
  %v45 = vunpack.c.l.b16 %v23
  %v46 = vpack.c.b16 %v39, %v38
  %v47 = vpack.c.b16 %v41, %v40
  %v48 = vpack.c.b16 %v43, %v42
  %v49 = vpack.c.b16 %v45, %v44
  %vm54 = vcmask 523264
  %v56 = vsel %vm54, %v15, 0
  %58 = vmatprep.subr.bf16.mxu0 0
  %59 = vmatpush1.bf16.msra.mxu0 %v46
  %60 = vmatprep.subr.bf16.mxu0 0
  %61 = vmatpush1.bf16.msra.mxu0 %v47
  %62 = vmatprep.subr.bf16.mxu0 0
  %63 = vmatpush1.bf16.msra.mxu0 %v48
  %64 = vmatprep.subr.bf16.mxu0 0
  %65 = vmatpush1.bf16.msra.mxu0 %v49
  %66 = vmatprep.subr.bf16.mxu0 0
  %67 = vmatpush1.bf16.msra.mxu0 0
  %68 = vmatprep.subr.bf16.mxu0 0
  %69 = vmatpush1.bf16.msra.mxu0 0
  %70 = vmatprep.subr.bf16.mxu0 0
  %71 = vmatpush1.bf16.msra.mxu0 0
  %72 = vmatprep.subr.bf16.mxu0 0
  %73 = vmatpush1.bf16.msra.mxu0 0
  %74 = vmatprep.subr.bf16.mxu0 0
  %75 = vmatpush1.bf16.msra.mxu0 0
  %76 = vmatprep.subr.bf16.mxu0 0
  %77 = vmatpush1.bf16.msra.mxu0 0
  %78 = vmatprep.subr.bf16.mxu0 0
  %79 = vmatpush1.bf16.msra.mxu0 0
  %80 = vmatprep.subr.bf16.mxu0 0
  %81 = vmatpush1.bf16.msra.mxu0 0
  %82 = vmatprep.subr.bf16.mxu0 0
  %83 = vmatpush1.bf16.msra.mxu0 0
  %84 = vmatprep.subr.bf16.mxu0 0
  %85 = vmatpush1.bf16.msra.mxu0 0
  %86 = vmatprep.subr.bf16.mxu0 0
  %87 = vmatpush1.bf16.msra.mxu0 0
  %88 = vmatprep.subr.bf16.mxu0 0
  %89 = vmatpush1.bf16.msra.mxu0 0
  %90 = vmatprep.mubr.bf16.mxu0 0
  %91 = vmatmul.mubr.bf16.gmra.mrb[0].mxu0 %v56
  %v92 = vpop.f32.mrb[0].mxu0
  %v93 = vadd.f32 %v28, %v92
  %v94 = vpop.f32.mrb[0].mxu0
  %v95 = vpop.f32.mrb[0].mxu0
  %v96 = vpop.f32.mrb[0].mxu0
  %97 = vdwg.mxu0
  %v98 = vmax.f32 %v93, 0.0
  %vm99 = vcmask 261120
  %100 = vst.msk [vmem:[%s3] sm:$0xff] %vm99, %v98
  // Predicated region
  $region14: #{downsample_x4.1} parent=0 // pred_check
    _
  $region15: #{downsample_x4.1} parent=0 // pred_check_branch
    %102 = sbr.rel (0) target = $region17
  $region16: #{downsample_x4.1} parent=0 // pred_region
    _
  $region17: #{downsample_x4.1} parent=0 // pred_fallthru
    _
  // Predicated region
  $region18: #{downsample_x4.1} parent=0 // pred_check
    _
  $region19: #{downsample_x4.1} parent=0 // pred_check_branch
    %104 = sbr.rel (0) target = $region21
  $region20: #{downsample_x4.1} parent=0 // pred_region
    _
  $region21: #{downsample_x4.1} parent=0 // pred_fallthru
    _

</llo_original>
